<compile_context>
chip_gen: v7x
topology: tpu7x:2x2x1
jax: 0.10.0
libtpu: 0.0.40
codegen_flags: <defaults>
</compile_context>

<pallas_src>
import jax
import jax.numpy as jnp
from jax.experimental import pallas as pl
from jax.experimental.pallas import tpu as pltpu


def _round_up(x, m):
    return ((x + m - 1) // m) * m


def critic_kernel(x_ref, wsa_ref, bsa_ref, w1_ref, b1_ref,
                  w2_ref, b2_ref, w3_ref, b3_ref, out_ref):
    """One batch tile, transposed layout: x_ref is (S+A, tm) bf16, batch on lanes."""
    # Consolidated first layer: concat(h_s, h_a)^T = tanh(Wsa^T @ x^T + bsa).
    h = jnp.tanh(
        jnp.dot(wsa_ref[...], x_ref[...],
                preferred_element_type=jnp.float32) + bsa_ref[...])

    # Linear(256, 256) + ReLU.
    h1 = jnp.maximum(
        jnp.dot(w1_ref[...], h.astype(jnp.bfloat16),
                preferred_element_type=jnp.float32) + b1_ref[...], 0.0)

    # Linear(256, 64) + tanh.
    h2 = jnp.tanh(
        jnp.dot(w2_ref[...], h1.astype(jnp.bfloat16),
                preferred_element_type=jnp.float32) + b2_ref[...])

    # Linear(64, 1): VPU multiply + sublane reduce -> lane-dense (1, tm) row.
    out_ref[...] = (jnp.sum(h2 * w3_ref[...], axis=0, keepdims=True)
                    + b3_ref[0, 0])


def atlas_index_critic(state, action, kparams, *, tile_m=2048):
    """Fused critic forward. state: (B, S) f32, action: (B, A) f32.
    kparams from prepare_params(). Returns (B, 1) f32."""
    B, S = state.shape
    A = action.shape[1]
    F = S + A

    # --- Batch tiling: balanced tiles, >=2 grid steps for large B (v7x). ---
    n_tiles = pl.cdiv(B, tile_m)
    if B >= 1024 and n_tiles < 2:
        n_tiles = 2                       # give v7x's 2nd TensorCore work
    if n_tiles == 1:
        tm = B                            # block == full array: no padding
    else:
        tm = _round_up(pl.cdiv(B, n_tiles), 128)   # lane-aligned, balanced
    b_pad = n_tiles * tm

    # Concatenate, cast to bf16 once, and transpose so batch is the lane axis.
    xT = jnp.concatenate([state, action], axis=1).astype(jnp.bfloat16).T  # (F, B)
    if b_pad != B:
        xT = jnp.pad(xT, ((0, 0), (0, b_pad - B)))

    wsaT, bsa = kparams["wsaT"], kparams["bsa"]
    w1T, b1 = kparams["w1T"], kparams["b1"]
    w2T, b2 = kparams["w2T"], kparams["b2"]
    w3, b3 = kparams["w3"], kparams["b3"]

    def resident_spec(arr):               # constant index -> stays in VMEM
        return pl.BlockSpec(arr.shape, lambda i: (0, 0))

    flops = 2 * b_pad * (F * 256 + 256 * 256 + 256 * 64 + 64)
    transcendentals = b_pad * (256 + 64)
    weight_bytes = sum(int(x.size * x.dtype.itemsize)
                       for x in (wsaT, bsa, w1T, b1, w2T, b2, w3, b3))
    bytes_accessed = int(xT.size * 2 + weight_bytes + b_pad * 4)

    out_row = pl.pallas_call(
        critic_kernel,
        out_shape=jax.ShapeDtypeStruct((1, b_pad), jnp.float32),
        grid=(n_tiles,),
        in_specs=[
            pl.BlockSpec((F, tm), lambda i: (0, i)),            # activations
            resident_spec(wsaT), resident_spec(bsa),
            resident_spec(w1T), resident_spec(b1),
            resident_spec(w2T), resident_spec(b2),
            resident_spec(w3),
            pl.BlockSpec(memory_space=pltpu.MemorySpace.SMEM),  # b3 (1,1)
        ],
        out_specs=pl.BlockSpec((1, tm), lambda i: (0, i)),      # lane-dense row
        compiler_params=pltpu.CompilerParams(
            dimension_semantics=("parallel",),   # v7x: tiles over both TCs
            vmem_limit_bytes=32 * 1024 * 1024,
        ),
        cost_estimate=pl.CostEstimate(
            flops=flops,
            transcendentals=transcendentals,
            bytes_accessed=bytes_accessed),
    )(xT, wsaT, bsa, w1T, b1, w2T, b2, w3, b3)

    return out_row[0, :B].reshape(B, 1)


def init_params(key, state_num, action_num):
    """Deterministic f32 init matching _init_weights: W ~ N(0, 0.01),
    b ~ U(-0.1, 0.1). Weights stored (in, out)."""
    ks = jax.random.split(key, 10)

    def lin(kw, kb, n_in, n_out):
        w = 0.01 * jax.random.normal(kw, (n_in, n_out), dtype=jnp.float32)
        b = jax.random.uniform(kb, (1, n_out), dtype=jnp.float32,
                               minval=-0.1, maxval=0.1)
        return w, b

    ws, bs = lin(ks[0], ks[1], state_num, 128)
    wa, ba = lin(ks[2], ks[3], action_num, 128)
    w1, b1 = lin(ks[4], ks[5], 256, 256)
    w2, b2 = lin(ks[6], ks[7], 256, 64)
    w3, b3 = lin(ks[8], ks[9], 64, 1)
    return dict(ws=ws, bs=bs, wa=wa, ba=ba,
                w1=w1, b1=b1, w2=w2, b2=b2, w3=w3, b3=b3)


def prepare_params(p):
    """Kernel layout: transposed ("batch on lanes") bf16 MXU weights, first
    layer consolidated into a block-diagonal [ [Ws,0],[0,Wa] ] matrix,
    column biases, W3 as a (64,1) f32 column, b3 as a (1,1) SMEM scalar."""
    S = p["ws"].shape[0]
    A = p["wa"].shape[0]
    wsa = jnp.zeros((S + A, 256), jnp.float32)
    wsa = wsa.at[:S, :128].set(p["ws"])
    wsa = wsa.at[S:, 128:].set(p["wa"])
    return dict(
        wsaT=wsa.T.astype(jnp.bfloat16),                          # (256, S+A)
        bsa=jnp.concatenate([p["bs"], p["ba"]], axis=1).T,        # (256, 1)
        w1T=p["w1"].T.astype(jnp.bfloat16),                       # (256, 256)
        b1=p["b1"].T,                                             # (256, 1)
        w2T=p["w2"].T.astype(jnp.bfloat16),                       # (64, 256)
        b2=p["b2"].T,                                             # (64, 1)
        w3=p["w3"].reshape(64, 1).astype(jnp.float32),            # (64, 1)
        b3=p["b3"].reshape(1, 1).astype(jnp.float32),             # (1, 1)
    )


def reference_forward(state, action, p):
    """Pure-JAX f32 reference (mirrors the PyTorch forward)."""
    h_s = jnp.tanh(state @ p["ws"] + p["bs"])
    h_a = jnp.tanh(action @ p["wa"] + p["ba"])
    h = jnp.concatenate([h_s, h_a], axis=1)
    h1 = jax.nn.relu(h @ p["w1"] + p["b1"])
    h2 = jnp.tanh(h1 @ p["w2"] + p["b2"])
    return h2 @ p["w3"] + p["b3"]


if __name__ == "__main__":
    STATE_NUM, ACTION_NUM = 32, 16

    key = jax.random.PRNGKey(0)
    k_s1, k_a1, k_s2, k_a2, k_params = jax.random.split(key, 5)

    params = init_params(k_params, STATE_NUM, ACTION_NUM)
    kparams = prepare_params(params)

    # Small correctness shape (single tile, block == full array).
    B = 8
    state = jax.random.normal(k_s1, (B, STATE_NUM), dtype=jnp.float32)
    action = jax.random.normal(k_a1, (B, ACTION_NUM), dtype=jnp.float32)
    out = jax.block_until_ready(atlas_index_critic(state, action, kparams))
    ref = reference_forward(state, action, params)
    assert out.shape == (B, 1)
    assert jnp.allclose(out, ref, atol=2e-3, rtol=2e-3), (
        float(jnp.max(jnp.abs(out - ref))))

    # Multi-tile path: exercises the grid, balanced-tile padding and slicing.
    B2 = 300
    state2 = jax.random.normal(k_s2, (B2, STATE_NUM), dtype=jnp.float32)
    action2 = jax.random.normal(k_a2, (B2, ACTION_NUM), dtype=jnp.float32)
    out2 = jax.block_until_ready(
        atlas_index_critic(state2, action2, kparams, tile_m=128))
    ref2 = reference_forward(state2, action2, params)
    assert out2.shape == (B2, 1)
    assert jnp.allclose(out2, ref2, atol=2e-3, rtol=2e-3), (
        float(jnp.max(jnp.abs(out2 - ref2))))

    print("KERNEL_OK")
</pallas_src>

<mosaic_0001>
module attributes {stable_mosaic.version = 11 : i64} {
  func.func @critic_kernel(%arg0: i32, %arg1: memref<48x8xbf16, #tpu.memory_space<vmem>>, %arg2: memref<256x48xbf16, #tpu.memory_space<vmem>>, %arg3: memref<256x1xf32, #tpu.memory_space<vmem>>, %arg4: memref<256x256xbf16, #tpu.memory_space<vmem>>, %arg5: memref<256x1xf32, #tpu.memory_space<vmem>>, %arg6: memref<64x256xbf16, #tpu.memory_space<vmem>>, %arg7: memref<64x1xf32, #tpu.memory_space<vmem>>, %arg8: memref<64x1xf32, #tpu.memory_space<vmem>>, %arg9: memref<1x1xf32, #tpu.memory_space<smem>>, %arg10: memref<1x8xf32, #tpu.memory_space<vmem>>) attributes {dimension_semantics = [#tpu.dimension_semantics<parallel>], iteration_bounds = array<i64: 1>, scalar_prefetch = 0 : i64, scratch_operands = 0 : i64, tpu.core_type = #tpu.core_type<tc>, window_params = [{transform_indices = @transform_0, window_bounds = array<i64: 48, 8>}, {pipeline_mode = #tpu.pipeline_mode<synchronous>, transform_indices = @transform_1, window_bounds = array<i64: 256, 48>}, {pipeline_mode = #tpu.pipeline_mode<synchronous>, transform_indices = @transform_2, window_bounds = array<i64: 256, 1>}, {pipeline_mode = #tpu.pipeline_mode<synchronous>, transform_indices = @transform_3, window_bounds = array<i64: 256, 256>}, {pipeline_mode = #tpu.pipeline_mode<synchronous>, transform_indices = @transform_4, window_bounds = array<i64: 256, 1>}, {pipeline_mode = #tpu.pipeline_mode<synchronous>, transform_indices = @transform_5, window_bounds = array<i64: 64, 256>}, {pipeline_mode = #tpu.pipeline_mode<synchronous>, transform_indices = @transform_6, window_bounds = array<i64: 64, 1>}, {pipeline_mode = #tpu.pipeline_mode<synchronous>, transform_indices = @transform_7, window_bounds = array<i64: 64, 1>}, {transform_indices = @transform_8, window_bounds = array<i64: 1, 1>}, {transform_indices = @transform_9, window_bounds = array<i64: 1, 8>}]} {
    %c0 = arith.constant 0 : index
    %c0_0 = arith.constant 0 : index
    %0 = vector.load %arg2[%c0, %c0_0] : memref<256x48xbf16, #tpu.memory_space<vmem>>, vector<256x48xbf16>
    %c0_1 = arith.constant 0 : index
    %c0_2 = arith.constant 0 : index
    %1 = vector.load %arg1[%c0_1, %c0_2] : memref<48x8xbf16, #tpu.memory_space<vmem>>, vector<48x8xbf16>
    %cst = arith.constant dense<0.000000e+00> : vector<256x8xf32>
    %2 = tpu.matmul %0, %1, %cst {dimension_numbers = #tpu.dot_dimension_numbers<[1], [0], [0], [1], [0, 0, 1, 1], [], []>} : vector<256x48xbf16>, vector<48x8xbf16>, vector<256x8xf32> -> vector<256x8xf32>
    %c0_3 = arith.constant 0 : index
    %c0_4 = arith.constant 0 : index
    %3 = vector.load %arg3[%c0_3, %c0_4] : memref<256x1xf32, #tpu.memory_space<vmem>>, vector<256x1xf32>
    %4 = vector.broadcast %3 : vector<256x1xf32> to vector<256x8xf32>
    %5 = arith.addf %2, %4 : vector<256x8xf32>
    %6 = math.tanh %5 : vector<256x8xf32>
    %c0_5 = arith.constant 0 : index
    %c0_6 = arith.constant 0 : index
    %7 = vector.load %arg4[%c0_5, %c0_6] : memref<256x256xbf16, #tpu.memory_space<vmem>>, vector<256x256xbf16>
    %8 = arith.truncf %6 : vector<256x8xf32> to vector<256x8xbf16>
    %cst_7 = arith.constant dense<0.000000e+00> : vector<256x8xf32>
    %9 = tpu.matmul %7, %8, %cst_7 {dimension_numbers = #tpu.dot_dimension_numbers<[1], [0], [0], [1], [0, 0, 1, 1], [], []>} : vector<256x256xbf16>, vector<256x8xbf16>, vector<256x8xf32> -> vector<256x8xf32>
    %c0_8 = arith.constant 0 : index
    %c0_9 = arith.constant 0 : index
    %10 = vector.load %arg5[%c0_8, %c0_9] : memref<256x1xf32, #tpu.memory_space<vmem>>, vector<256x1xf32>
    %11 = vector.broadcast %10 : vector<256x1xf32> to vector<256x8xf32>
    %12 = arith.addf %9, %11 : vector<256x8xf32>
    %cst_10 = arith.constant 0.000000e+00 : f32
    %13 = vector.broadcast %cst_10 : f32 to vector<256x8xf32>
    %14 = arith.maximumf %12, %13 : vector<256x8xf32>
    %c0_11 = arith.constant 0 : index
    %c0_12 = arith.constant 0 : index
    %15 = vector.load %arg6[%c0_11, %c0_12] : memref<64x256xbf16, #tpu.memory_space<vmem>>, vector<64x256xbf16>
    %16 = arith.truncf %14 : vector<256x8xf32> to vector<256x8xbf16>
    %cst_13 = arith.constant dense<0.000000e+00> : vector<64x8xf32>
    %17 = tpu.matmul %15, %16, %cst_13 {dimension_numbers = #tpu.dot_dimension_numbers<[1], [0], [0], [1], [0, 0, 1, 1], [], []>} : vector<64x256xbf16>, vector<256x8xbf16>, vector<64x8xf32> -> vector<64x8xf32>
    %c0_14 = arith.constant 0 : index
    %c0_15 = arith.constant 0 : index
    %18 = vector.load %arg7[%c0_14, %c0_15] : memref<64x1xf32, #tpu.memory_space<vmem>>, vector<64x1xf32>
    %19 = vector.broadcast %18 : vector<64x1xf32> to vector<64x8xf32>
    %20 = arith.addf %17, %19 : vector<64x8xf32>
    %21 = math.tanh %20 : vector<64x8xf32>
    %c0_16 = arith.constant 0 : index
    %c0_17 = arith.constant 0 : index
    %22 = vector.load %arg8[%c0_16, %c0_17] : memref<64x1xf32, #tpu.memory_space<vmem>>, vector<64x1xf32>
    %23 = vector.broadcast %22 : vector<64x1xf32> to vector<64x8xf32>
    %24 = arith.mulf %21, %23 : vector<64x8xf32>
    %cst_18 = arith.constant dense<0.000000e+00> : vector<8xf32>
    %25 = vector.multi_reduction <add>, %24, %cst_18 [0] : vector<64x8xf32> to vector<8xf32>
    %26 = vector.shape_cast %25 : vector<8xf32> to vector<1x8xf32>
    %c0_19 = arith.constant 0 : index
    %c0_20 = arith.constant 0 : index
    %27 = memref.load %arg9[%c0_19, %c0_20] : memref<1x1xf32, #tpu.memory_space<smem>>
    %28 = vector.broadcast %27 : f32 to vector<1x8xf32>
    %29 = arith.addf %26, %28 : vector<1x8xf32>
    %c0_21 = arith.constant 0 : index
    %c0_22 = arith.constant 0 : index
    %30 = vector.load %arg10[%c0_21, %c0_22] : memref<1x8xf32, #tpu.memory_space<vmem>>, vector<1x8xf32>
    tpu.vector_store %arg10[%c0_21, %c0_22], %29 {strides = array<i32>} : memref<1x8xf32, #tpu.memory_space<vmem>>, vector<1x8xf32>,
    return
  }
  func.func @transform_0(%arg0: i32) -> (i32, i32) {
    %c0_i32 = arith.constant 0 : i32
    %c0_i32_0 = arith.constant 0 : i32
    return %c0_i32, %arg0 : i32, i32
  }
  func.func @transform_1(%arg0: i32) -> (i32, i32) {
    %c0_i32 = arith.constant 0 : i32
    %c0_i32_0 = arith.constant 0 : i32
    %c0_i32_1 = arith.constant 0 : i32
    return %c0_i32, %c0_i32_0 : i32, i32
  }
  func.func @transform_2(%arg0: i32) -> (i32, i32) {
    %c0_i32 = arith.constant 0 : i32
    %c0_i32_0 = arith.constant 0 : i32
    %c0_i32_1 = arith.constant 0 : i32
    return %c0_i32, %c0_i32_0 : i32, i32
  }
  func.func @transform_3(%arg0: i32) -> (i32, i32) {
    %c0_i32 = arith.constant 0 : i32
    %c0_i32_0 = arith.constant 0 : i32
    %c0_i32_1 = arith.constant 0 : i32
    return %c0_i32, %c0_i32_0 : i32, i32
  }
  func.func @transform_4(%arg0: i32) -> (i32, i32) {
    %c0_i32 = arith.constant 0 : i32
    %c0_i32_0 = arith.constant 0 : i32
    %c0_i32_1 = arith.constant 0 : i32
    return %c0_i32, %c0_i32_0 : i32, i32
  }
  func.func @transform_5(%arg0: i32) -> (i32, i32) {
    %c0_i32 = arith.constant 0 : i32
    %c0_i32_0 = arith.constant 0 : i32
    %c0_i32_1 = arith.constant 0 : i32
    return %c0_i32, %c0_i32_0 : i32, i32
  }
  func.func @transform_6(%arg0: i32) -> (i32, i32) {
    %c0_i32 = arith.constant 0 : i32
    %c0_i32_0 = arith.constant 0 : i32
    %c0_i32_1 = arith.constant 0 : i32
    return %c0_i32, %c0_i32_0 : i32, i32
  }
  func.func @transform_7(%arg0: i32) -> (i32, i32) {
    %c0_i32 = arith.constant 0 : i32
    %c0_i32_0 = arith.constant 0 : i32
    %c0_i32_1 = arith.constant 0 : i32
    return %c0_i32, %c0_i32_0 : i32, i32
  }
  func.func @transform_8(%arg0: i32) -> (i32, i32) {
    %c0_i32 = arith.constant 0 : i32
    %c0_i32_0 = arith.constant 0 : i32
    %c0_i32_1 = arith.constant 0 : i32
    return %c0_i32, %c0_i32_0 : i32, i32
  }
  func.func @transform_9(%arg0: i32) -> (i32, i32) {
    %c0_i32 = arith.constant 0 : i32
    %c0_i32_0 = arith.constant 0 : i32
    return %c0_i32, %arg0 : i32, i32
  }
}

</mosaic_0001>

<llo_original>
// kernel: tpu_custom_call.1
$region0: #{tpu_custom_call.1}
  #allocation0 [shape = 'u32[]', space=smem, size = 0x4, offset = 0x4, fixed_abs, tag = 'smem constant byte address 0x4 - core index']
  #allocation1 [shape = 'u32[144,128]{1,0:T(1,128)}', space=vmem, size = 0x12000, scoped, tag = 'internal scratch']
  #allocation2 [shape = 'f32[1,1]{1,0:T(1,128)S(6)}', space=smem, size = 0x200, scoped, tag = 'scoped memory for tpu_custom_call.1']
  %s0 = inlined_call_operand.vmem [shape: bf16[48,8], index: 0, kind: input, shape index: {}]
  %s1 = inlined_call_operand.vmem [shape: bf16[256,48], index: 1, kind: input, shape index: {}]
  %s2 = inlined_call_operand.vmem [shape: f32[256,1], index: 2, kind: input, shape index: {}]
  %s3 = inlined_call_operand.vmem [shape: bf16[256,256], index: 3, kind: input, shape index: {}]
  %s4 = inlined_call_operand.vmem [shape: f32[256,1], index: 4, kind: input, shape index: {}]
  %s5 = inlined_call_operand.vmem [shape: bf16[64,256], index: 5, kind: input, shape index: {}]
  %s6 = inlined_call_operand.vmem [shape: f32[64,1], index: 6, kind: input, shape index: {}]
  %s7 = inlined_call_operand.vmem [shape: f32[64,1], index: 7, kind: input, shape index: {}]
  %s8 = inlined_call_operand.<no memory space> [shape: f32[1,1], index: 8, kind: input, shape index: {}]
  %s9 = inlined_call_operand.hbm [shape: f32[1,8], index: 9, kind: output, shape index: {}]
  %s10 = sld [smem:[#allocation0]]
  $region46: #{tpu_custom_call.1} parent=0
    _
  %s12 = ssub.s32 1, %s10
  %s13 = scalar_select 0, %s12, %s10
  %14 = sst [smem:[#allocation2]] %s8
  $region1: #{tpu_custom_call.1} parent=0
    #allocation3 [shape = 'u8[512]{0}', space=vmem, size = 0x400, scoped, tag = 'output window, operand 0, single buffered']
    #allocation4 [shape = 's32[1]{0}', space=sflag, size = 0x4, scoped, tag = 'scoped memory for tpu_custom_call.1']
    %15 = vsyncpa [#allocation4], 0
    // Predicated region
    $region2: #{tpu_custom_call.1} parent=1 // pred_check
      _
    $region3: #{tpu_custom_call.1} parent=1 // pred_check_branch
      %17 = sbr.rel (0) target = $region5
    $region4: #{tpu_custom_call.1} parent=1 // pred_region
      _
    $region5: #{tpu_custom_call.1} parent=1 // pred_fallthru
      _
    // Predicated region
    $region6: #{tpu_custom_call.1} parent=1 // pred_check
      _
    $region7: #{tpu_custom_call.1} parent=1 // pred_check_branch
      %19 = sbr.rel (0) target = $region9
    $region8: #{tpu_custom_call.1} parent=1 // pred_region
      _
    $region9: #{tpu_custom_call.1} parent=1 // pred_fallthru
      _
    // Predicated region
    $region10: #{tpu_custom_call.1} parent=1 // pred_check
      _
    $region11: #{tpu_custom_call.1} parent=1 // pred_check_branch
      %21 = sbr.rel (0) target = $region13
    $region12: #{tpu_custom_call.1} parent=1 // pred_region
      _
    $region13: #{tpu_custom_call.1} parent=1 // pred_fallthru
      _
    // Predicated region
    $region14: #{tpu_custom_call.1} parent=1 // pred_check
      _
    $region15: #{tpu_custom_call.1} parent=1 // pred_check_branch
      %23 = sbr.rel (0) target = $region17
    $region16: #{tpu_custom_call.1} parent=1 // pred_region
      _
    $region17: #{tpu_custom_call.1} parent=1 // pred_fallthru
      _
    // Predicated region
    $region18: #{tpu_custom_call.1} parent=1 // pred_check
      _
    $region19: #{tpu_custom_call.1} parent=1 // pred_check_branch
      %25 = sbr.rel (0) target = $region21
    $region20: #{tpu_custom_call.1} parent=1 // pred_region
      _
    $region21: #{tpu_custom_call.1} parent=1 // pred_fallthru
      _
    // Predicated region
    $region22: #{tpu_custom_call.1} parent=1 // pred_check
      _
    $region23: #{tpu_custom_call.1} parent=1 // pred_check_branch
      %27 = sbr.rel (0) target = $region25
    $region24: #{tpu_custom_call.1} parent=1 // pred_region
      _
    $region25: #{tpu_custom_call.1} parent=1 // pred_fallthru
      _
    // Predicated region
    $region26: #{tpu_custom_call.1} parent=1 // pred_check
      _
    $region27: #{tpu_custom_call.1} parent=1 // pred_check_branch
      %29 = sbr.rel (0) target = $region29
    $region28: #{tpu_custom_call.1} parent=1 // pred_region
      _
    $region29: #{tpu_custom_call.1} parent=1 // pred_fallthru
      _
    // Predicated region
    $region30: #{tpu_custom_call.1} parent=1 // pred_check
      _
    $region31: #{tpu_custom_call.1} parent=1 // pred_check_branch
      %31 = sbr.rel (0) target = $region33
    $region32: #{tpu_custom_call.1} parent=1 // pred_region
      _
    $region33: #{tpu_custom_call.1} parent=1 // pred_fallthru
      _
    // Predicated region
    $region34: #{tpu_custom_call.1} parent=1 // pred_check
      _
    $region35: #{tpu_custom_call.1} parent=1 // pred_check_branch
      %33 = sbr.rel (0) target = $region37
    $region36: #{tpu_custom_call.1} parent=1 // pred_region
      _
    $region37: #{tpu_custom_call.1} parent=1 // pred_fallthru
      _
    %v35 = vld [vmem:[%s1] sm:$0xf]
    %v36 = vld [vmem:[%s1 + $0x4] sm:$0xf]
    %v37 = vld [vmem:[%s1 + $0x8] sm:$0xf]
    %v38 = vld [vmem:[%s1 + $0xc] sm:$0xf]
    %v39 = vld [vmem:[%s1 + $0x10] sm:$0xf]
    %v40 = vld [vmem:[%s1 + $0x14] sm:$0xf]
    %v41 = vld [vmem:[%s1 + $0x18] sm:$0xf]
    %v42 = vld [vmem:[%s1 + $0x1c] sm:$0xf]
    %v43 = vld [vmem:[%s1 + $0x20] sm:$0xf]
    %v44 = vld [vmem:[%s1 + $0x24] sm:$0xf]
    %v45 = vld [vmem:[%s1 + $0x28] sm:$0xf]
    %v46 = vld [vmem:[%s1 + $0x2c] sm:$0xf]
    %v47 = vld [vmem:[%s1 + $0x30] sm:$0xf]
    %v48 = vld [vmem:[%s1 + $0x34] sm:$0xf]
    %v49 = vld [vmem:[%s1 + $0x38] sm:$0xf]
    %v50 = vld [vmem:[%s1 + $0x3c] sm:$0xf]
    %v51 = vld [vmem:[%s1 + $0x40] sm:$0xf]
    %v52 = vld [vmem:[%s1 + $0x44] sm:$0xf]
    %v53 = vld [vmem:[%s1 + $0x48] sm:$0xf]
    %v54 = vld [vmem:[%s1 + $0x4c] sm:$0xf]
    %v55 = vld [vmem:[%s1 + $0x50] sm:$0xf]
    %v56 = vld [vmem:[%s1 + $0x54] sm:$0xf]
    %v57 = vld [vmem:[%s1 + $0x58] sm:$0xf]
    %v58 = vld [vmem:[%s1 + $0x5c] sm:$0xf]
    %v59 = vld [vmem:[%s1 + $0x60] sm:$0xf]
    %v60 = vld [vmem:[%s1 + $0x64] sm:$0xf]
    %v61 = vld [vmem:[%s1 + $0x68] sm:$0xf]
    %v62 = vld [vmem:[%s1 + $0x6c] sm:$0xf]
    %v63 = vld [vmem:[%s1 + $0x70] sm:$0xf]
    %v64 = vld [vmem:[%s1 + $0x74] sm:$0xf]
    %v65 = vld [vmem:[%s1 + $0x78] sm:$0xf]
    %v66 = vld [vmem:[%s1 + $0x7c] sm:$0xf]
    %v67 = vld [vmem:[%s0] sm:$0xf]
    %v68 = vld [vmem:[%s0 + $0x4] sm:$0xf]
    %v69 = vld [vmem:[%s0 + $0x8] sm:$0xf]
    %v70 = vld [vmem:[%s0 + $0xc] sm:$0xf]
    %v71 = vld [vmem:[%s0 + $0x10] sm:$0xf]
    %v72 = vld [vmem:[%s0 + $0x14] sm:$0xf]
    %v73 = vld [vmem:[%s2] sm:$0xff]
    %v74 = vld [vmem:[%s2 + $0x8] sm:$0xff]
    %v75 = vld [vmem:[%s2 + $0x10] sm:$0xff]
    %v76 = vld [vmem:[%s2 + $0x18] sm:$0xff]
    %v77 = vld [vmem:[%s2 + $0x20] sm:$0xff]
    %v78 = vld [vmem:[%s2 + $0x28] sm:$0xff]
    %v79 = vld [vmem:[%s2 + $0x30] sm:$0xff]
    %v80 = vld [vmem:[%s2 + $0x38] sm:$0xff]
    %v81 = vld [vmem:[%s2 + $0x40] sm:$0xff]
    %v82 = vld [vmem:[%s2 + $0x48] sm:$0xff]
    %v83 = vld [vmem:[%s2 + $0x50] sm:$0xff]
    %v84 = vld [vmem:[%s2 + $0x58] sm:$0xff]
    %v85 = vld [vmem:[%s2 + $0x60] sm:$0xff]
    %v86 = vld [vmem:[%s2 + $0x68] sm:$0xff]
    %v87 = vld [vmem:[%s2 + $0x70] sm:$0xff]
    %v88 = vld [vmem:[%s2 + $0x78] sm:$0xff]
    %v89 = vld [vmem:[%s2 + $0x80] sm:$0xff]
    %v90 = vld [vmem:[%s2 + $0x88] sm:$0xff]
    %v91 = vld [vmem:[%s2 + $0x90] sm:$0xff]
    %v92 = vld [vmem:[%s2 + $0x98] sm:$0xff]
    %v93 = vld [vmem:[%s2 + $0xa0] sm:$0xff]
    %v94 = vld [vmem:[%s2 + $0xa8] sm:$0xff]
    %v95 = vld [vmem:[%s2 + $0xb0] sm:$0xff]
    %v96 = vld [vmem:[%s2 + $0xb8] sm:$0xff]
    %v97 = vld [vmem:[%s2 + $0xc0] sm:$0xff]
    %v98 = vld [vmem:[%s2 + $0xc8] sm:$0xff]
    %v99 = vld [vmem:[%s2 + $0xd0] sm:$0xff]
    %v100 = vld [vmem:[%s2 + $0xd8] sm:$0xff]
    %v101 = vld [vmem:[%s2 + $0xe0] sm:$0xff]
    %v102 = vld [vmem:[%s2 + $0xe8] sm:$0xff]
    %v103 = vld [vmem:[%s2 + $0xf0] sm:$0xff]
    %v104 = vld [vmem:[%s2 + $0xf8] sm:$0xff]
    %106 = vset.pattern.permute.xlu0 0
    %107 = vperm.xlu0 %106, %v73
    %v108 = vpop.permute.xlu0 %107
    %111 = vset.pattern.permute.xlu0 0
    %112 = vperm.xlu0 %111, %v74
    %v113 = vpop.permute.xlu0 %112
    %116 = vset.pattern.permute.xlu0 0
    %117 = vperm.xlu0 %116, %v75
    %v118 = vpop.permute.xlu0 %117
    %121 = vset.pattern.permute.xlu0 0
    %122 = vperm.xlu0 %121, %v76
    %v123 = vpop.permute.xlu0 %122
    %126 = vset.pattern.permute.xlu0 0
    %127 = vperm.xlu0 %126, %v77
    %v128 = vpop.permute.xlu0 %127
    %131 = vset.pattern.permute.xlu0 0
    %132 = vperm.xlu0 %131, %v78
    %v133 = vpop.permute.xlu0 %132
    %136 = vset.pattern.permute.xlu0 0
    %137 = vperm.xlu0 %136, %v79
    %v138 = vpop.permute.xlu0 %137
    %141 = vset.pattern.permute.xlu0 0
    %142 = vperm.xlu0 %141, %v80
    %v143 = vpop.permute.xlu0 %142
    %146 = vset.pattern.permute.xlu0 0
    %147 = vperm.xlu0 %146, %v81
    %v148 = vpop.permute.xlu0 %147
    %151 = vset.pattern.permute.xlu0 0
    %152 = vperm.xlu0 %151, %v82
    %v153 = vpop.permute.xlu0 %152
    %156 = vset.pattern.permute.xlu0 0
    %157 = vperm.xlu0 %156, %v83
    %v158 = vpop.permute.xlu0 %157
    %161 = vset.pattern.permute.xlu0 0
    %162 = vperm.xlu0 %161, %v84
    %v163 = vpop.permute.xlu0 %162
    %166 = vset.pattern.permute.xlu0 0
    %167 = vperm.xlu0 %166, %v85
    %v168 = vpop.permute.xlu0 %167
    %171 = vset.pattern.permute.xlu0 0
    %172 = vperm.xlu0 %171, %v86
    %v173 = vpop.permute.xlu0 %172
    %176 = vset.pattern.permute.xlu0 0
    %177 = vperm.xlu0 %176, %v87
    %v178 = vpop.permute.xlu0 %177
    %181 = vset.pattern.permute.xlu0 0
    %182 = vperm.xlu0 %181, %v88
    %v183 = vpop.permute.xlu0 %182
    %186 = vset.pattern.permute.xlu0 0
    %187 = vperm.xlu0 %186, %v89
    %v188 = vpop.permute.xlu0 %187
    %191 = vset.pattern.permute.xlu0 0
    %192 = vperm.xlu0 %191, %v90
    %v193 = vpop.permute.xlu0 %192
    %196 = vset.pattern.permute.xlu0 0
    %197 = vperm.xlu0 %196, %v91
    %v198 = vpop.permute.xlu0 %197
    %201 = vset.pattern.permute.xlu0 0
    %202 = vperm.xlu0 %201, %v92
    %v203 = vpop.permute.xlu0 %202
    %206 = vset.pattern.permute.xlu0 0
    %207 = vperm.xlu0 %206, %v93
    %v208 = vpop.permute.xlu0 %207
    %211 = vset.pattern.permute.xlu0 0
    %212 = vperm.xlu0 %211, %v94
    %v213 = vpop.permute.xlu0 %212
    %216 = vset.pattern.permute.xlu0 0
    %217 = vperm.xlu0 %216, %v95
    %v218 = vpop.permute.xlu0 %217
    %221 = vset.pattern.permute.xlu0 0
    %222 = vperm.xlu0 %221, %v96
    %v223 = vpop.permute.xlu0 %222
    %226 = vset.pattern.permute.xlu0 0
    %227 = vperm.xlu0 %226, %v97
    %v228 = vpop.permute.xlu0 %227
    %231 = vset.pattern.permute.xlu0 0
    %232 = vperm.xlu0 %231, %v98
    %v233 = vpop.permute.xlu0 %232
    %236 = vset.pattern.permute.xlu0 0
    %237 = vperm.xlu0 %236, %v99
    %v238 = vpop.permute.xlu0 %237
    %241 = vset.pattern.permute.xlu0 0
    %242 = vperm.xlu0 %241, %v100
    %v243 = vpop.permute.xlu0 %242
    %246 = vset.pattern.permute.xlu0 0
    %247 = vperm.xlu0 %246, %v101
    %v248 = vpop.permute.xlu0 %247
    %251 = vset.pattern.permute.xlu0 0
    %252 = vperm.xlu0 %251, %v102
    %v253 = vpop.permute.xlu0 %252
    %256 = vset.pattern.permute.xlu0 0
    %257 = vperm.xlu0 %256, %v103
    %v258 = vpop.permute.xlu0 %257
    %261 = vset.pattern.permute.xlu0 0
    %262 = vperm.xlu0 %261, %v104
    %v263 = vpop.permute.xlu0 %262
    %v297 = vunpack.c.l.b16 %v35
    %v298 = vunpack.c.l.b16 %v36
    %v299 = vunpack.c.l.b16 %v37
    %v300 = vunpack.c.l.b16 %v38
    %v301 = vunpack.c.l.b16 %v39
    %v302 = vunpack.c.l.b16 %v40
    %v303 = vunpack.c.l.b16 %v41
    %v304 = vunpack.c.l.b16 %v42
    %v305 = vunpack.c.l.b16 %v43
    %v306 = vunpack.c.l.b16 %v44
    %v307 = vunpack.c.l.b16 %v45
    %v308 = vunpack.c.l.b16 %v46
    %v309 = vunpack.c.l.b16 %v47
    %v310 = vunpack.c.l.b16 %v48
    %v311 = vunpack.c.l.b16 %v49
    %v312 = vunpack.c.l.b16 %v50
    %v313 = vunpack.c.l.b16 %v51
    %v314 = vunpack.c.l.b16 %v52
    %v315 = vunpack.c.l.b16 %v53
    %v316 = vunpack.c.l.b16 %v54
    %v317 = vunpack.c.l.b16 %v55
    %v318 = vunpack.c.l.b16 %v56
    %v319 = vunpack.c.l.b16 %v57
    %v320 = vunpack.c.l.b16 %v58
    %v321 = vunpack.c.l.b16 %v59
    %v322 = vunpack.c.l.b16 %v60
    %v323 = vunpack.c.l.b16 %v61
    %v324 = vunpack.c.l.b16 %v62
    %v325 = vunpack.c.l.b16 %v63
    %v326 = vunpack.c.l.b16 %v64
    %v327 = vunpack.c.l.b16 %v65
    %v328 = vunpack.c.l.b16 %v66
    %v329 = vpack.c.b16 %v298, %v297
    %v330 = vpack.c.b16 %v300, %v299
    %v331 = vpack.c.b16 %v302, %v301
    %v332 = vpack.c.b16 %v304, %v303
    %v333 = vpack.c.b16 %v306, %v305
    %v334 = vpack.c.b16 %v308, %v307
    %v335 = vpack.c.b16 %v310, %v309
    %v336 = vpack.c.b16 %v312, %v311
    %v337 = vpack.c.b16 %v314, %v313
    %v338 = vpack.c.b16 %v316, %v315
    %v339 = vpack.c.b16 %v318, %v317
    %v340 = vpack.c.b16 %v320, %v319
    %v341 = vpack.c.b16 %v322, %v321
    %v342 = vpack.c.b16 %v324, %v323
    %v343 = vpack.c.b16 %v326, %v325
    %v344 = vpack.c.b16 %v328, %v327
    %v351 = vunpack.c.l.b16 %v67
    %v352 = vunpack.c.l.b16 %v68
    %v353 = vunpack.c.l.b16 %v69
    %v354 = vunpack.c.l.b16 %v70
    %v355 = vunpack.c.l.b16 %v71
    %v356 = vunpack.c.l.b16 %v72
    %v357 = vpack.c.b16 %v352, %v351
    %v358 = vpack.c.b16 %v354, %v353
    %v359 = vpack.c.b16 %v356, %v355
    %vm363 = vcmask 392192
    %v365 = vsel %vm363, %v329, 0
    %v368 = vsel %vm363, %v330, 0
    %v371 = vsel %vm363, %v331, 0
    %v374 = vsel %vm363, %v332, 0
    %v377 = vsel %vm363, %v333, 0
    %v380 = vsel %vm363, %v334, 0
    %v383 = vsel %vm363, %v335, 0
    %v386 = vsel %vm363, %v336, 0
    %v389 = vsel %vm363, %v337, 0
    %v392 = vsel %vm363, %v338, 0
    %v395 = vsel %vm363, %v339, 0
    %v398 = vsel %vm363, %v340, 0
    %v401 = vsel %vm363, %v341, 0
    %v404 = vsel %vm363, %v342, 0
    %v407 = vsel %vm363, %v343, 0
    %v410 = vsel %vm363, %v344, 0
    %412 = vmatprep.subr.bf16.mxu0 0
    %413 = vmatpush1.bf16.msra.mxu0 %v357
    %414 = vmatprep.subr.bf16.mxu0 0
    %415 = vmatpush1.bf16.msra.mxu0 %v358
    %416 = vmatprep.subr.bf16.mxu0 0
    %417 = vmatpush1.bf16.msra.mxu0 %v359
    %418 = vmatprep.subr.bf16.mxu0 0
    %419 = vmatpush1.bf16.msra.mxu0 0
    %420 = vmatprep.subr.bf16.mxu0 0
    %421 = vmatpush1.bf16.msra.mxu0 0
    %422 = vmatprep.subr.bf16.mxu0 0
    %423 = vmatpush1.bf16.msra.mxu0 0
    %424 = vmatprep.subr.bf16.mxu0 0
    %425 = vmatpush1.bf16.msra.mxu0 0
    %426 = vmatprep.subr.bf16.mxu0 0
    %427 = vmatpush1.bf16.msra.mxu0 0
    %428 = vmatprep.subr.bf16.mxu0 0
    %429 = vmatpush1.bf16.msra.mxu0 0
    %430 = vmatprep.subr.bf16.mxu0 0
    %431 = vmatpush1.bf16.msra.mxu0 0
    %432 = vmatprep.subr.bf16.mxu0 0
    %433 = vmatpush1.bf16.msra.mxu0 0
    %434 = vmatprep.subr.bf16.mxu0 0
    %435 = vmatpush1.bf16.msra.mxu0 0
    %436 = vmatprep.subr.bf16.mxu0 0
    %437 = vmatpush1.bf16.msra.mxu0 0
    %438 = vmatprep.subr.bf16.mxu0 0
    %439 = vmatpush1.bf16.msra.mxu0 0
    %440 = vmatprep.subr.bf16.mxu0 0
    %441 = vmatpush1.bf16.msra.mxu0 0
    %442 = vmatprep.subr.bf16.mxu0 0
    %443 = vmatpush1.bf16.msra.mxu0 0
    %444 = vmatprep.mubr.bf16.mxu0 0
    %445 = vmatmul.mubr.bf16.gmra.mrb[0].mxu0 %v365
    %v446 = vpop.f32.mrb[0].mxu0
    %v447 = vadd.f32 %v108, %v446
    %v448 = vpop.f32.mrb[0].mxu0
    %v449 = vpop.f32.mrb[0].mxu0
    %v450 = vadd.f32 %v113, %v449
    %v451 = vpop.f32.mrb[0].mxu0
    %452 = vmatprep.mubr.bf16.mxu0 0
    %453 = vmatmul.mubr.bf16.gmra.mrb[0].mxu0 %v368
    %v454 = vpop.f32.mrb[0].mxu0
    %v455 = vadd.f32 %v118, %v454
    %v456 = vpop.f32.mrb[0].mxu0
    %v457 = vpop.f32.mrb[0].mxu0
    %v458 = vadd.f32 %v123, %v457
    %v459 = vpop.f32.mrb[0].mxu0
    %460 = vmatprep.mubr.bf16.mxu0 0
    %461 = vmatmul.mubr.bf16.gmra.mrb[0].mxu0 %v371
    %v462 = vpop.f32.mrb[0].mxu0
    %v463 = vadd.f32 %v128, %v462
    %v464 = vpop.f32.mrb[0].mxu0
    %v465 = vpop.f32.mrb[0].mxu0
    %v466 = vadd.f32 %v133, %v465
    %v467 = vpop.f32.mrb[0].mxu0
    %468 = vmatprep.mubr.bf16.mxu0 0
    %469 = vmatmul.mubr.bf16.gmra.mrb[0].mxu0 %v374
    %v470 = vpop.f32.mrb[0].mxu0
    %v471 = vadd.f32 %v138, %v470
    %v472 = vpop.f32.mrb[0].mxu0
    %v473 = vpop.f32.mrb[0].mxu0
    %v474 = vadd.f32 %v143, %v473
    %v475 = vpop.f32.mrb[0].mxu0
    %476 = vmatprep.mubr.bf16.mxu0 0
    %477 = vmatmul.mubr.bf16.gmra.mrb[0].mxu0 %v377
    %v478 = vpop.f32.mrb[0].mxu0
    %v479 = vadd.f32 %v148, %v478
    %v480 = vpop.f32.mrb[0].mxu0
    %v481 = vpop.f32.mrb[0].mxu0
    %v482 = vadd.f32 %v153, %v481
    %v483 = vpop.f32.mrb[0].mxu0
    %484 = vmatprep.mubr.bf16.mxu0 0
    %485 = vmatmul.mubr.bf16.gmra.mrb[0].mxu0 %v380
    %v486 = vpop.f32.mrb[0].mxu0
    %v487 = vadd.f32 %v158, %v486
    %v488 = vpop.f32.mrb[0].mxu0
    %v489 = vpop.f32.mrb[0].mxu0
    %v490 = vadd.f32 %v163, %v489
    %v491 = vpop.f32.mrb[0].mxu0
    %492 = vmatprep.mubr.bf16.mxu0 0
    %493 = vmatmul.mubr.bf16.gmra.mrb[0].mxu0 %v383
    %v494 = vpop.f32.mrb[0].mxu0
    %v495 = vadd.f32 %v168, %v494
    %v496 = vpop.f32.mrb[0].mxu0
    %v497 = vpop.f32.mrb[0].mxu0
    %v498 = vadd.f32 %v173, %v497
    %v499 = vpop.f32.mrb[0].mxu0
    %500 = vmatprep.mubr.bf16.mxu0 0
    %501 = vmatmul.mubr.bf16.gmra.mrb[0].mxu0 %v386
    %v502 = vpop.f32.mrb[0].mxu0
    %v503 = vadd.f32 %v178, %v502
    %v504 = vpop.f32.mrb[0].mxu0
    %v505 = vpop.f32.mrb[0].mxu0
    %v506 = vadd.f32 %v183, %v505
    %v507 = vpop.f32.mrb[0].mxu0
    %508 = vmatprep.mubr.bf16.mxu0 0
    %509 = vmatmul.mubr.bf16.gmra.mrb[0].mxu0 %v389
    %v510 = vpop.f32.mrb[0].mxu0
    %v511 = vadd.f32 %v188, %v510
    %v512 = vpop.f32.mrb[0].mxu0
    %v513 = vpop.f32.mrb[0].mxu0
    %v514 = vadd.f32 %v193, %v513
    %v515 = vpop.f32.mrb[0].mxu0
    %516 = vmatprep.mubr.bf16.mxu0 0
    %517 = vmatmul.mubr.bf16.gmra.mrb[0].mxu0 %v392
    %v518 = vpop.f32.mrb[0].mxu0
    %v519 = vadd.f32 %v198, %v518
    %v520 = vpop.f32.mrb[0].mxu0
    %v521 = vpop.f32.mrb[0].mxu0
    %v522 = vadd.f32 %v203, %v521
    %v523 = vpop.f32.mrb[0].mxu0
    %524 = vmatprep.mubr.bf16.mxu0 0
    %525 = vmatmul.mubr.bf16.gmra.mrb[0].mxu0 %v395
    %v526 = vpop.f32.mrb[0].mxu0
    %v527 = vadd.f32 %v208, %v526
    %v528 = vpop.f32.mrb[0].mxu0
    %v529 = vpop.f32.mrb[0].mxu0
    %v530 = vadd.f32 %v213, %v529
    %v531 = vpop.f32.mrb[0].mxu0
    %532 = vmatprep.mubr.bf16.mxu0 0
    %533 = vmatmul.mubr.bf16.gmra.mrb[0].mxu0 %v398
    %v534 = vpop.f32.mrb[0].mxu0
    %v535 = vadd.f32 %v218, %v534
    %v536 = vpop.f32.mrb[0].mxu0
    %v537 = vpop.f32.mrb[0].mxu0
    %v538 = vadd.f32 %v223, %v537
    %v539 = vpop.f32.mrb[0].mxu0
    %540 = vmatprep.mubr.bf16.mxu0 0
    %541 = vmatmul.mubr.bf16.gmra.mrb[0].mxu0 %v401
    %v542 = vpop.f32.mrb[0].mxu0
    %v543 = vadd.f32 %v228, %v542
    %v544 = vpop.f32.mrb[0].mxu0
    %v545 = vpop.f32.mrb[0].mxu0
    %v546 = vadd.f32 %v233, %v545
    %v547 = vpop.f32.mrb[0].mxu0
    %548 = vmatprep.mubr.bf16.mxu0 0
    %549 = vmatmul.mubr.bf16.gmra.mrb[0].mxu0 %v404
    %v550 = vpop.f32.mrb[0].mxu0
    %v551 = vadd.f32 %v238, %v550
    %v552 = vpop.f32.mrb[0].mxu0
    %v553 = vpop.f32.mrb[0].mxu0
    %v554 = vadd.f32 %v243, %v553
    %v555 = vpop.f32.mrb[0].mxu0
    %556 = vmatprep.mubr.bf16.mxu0 0
    %557 = vmatmul.mubr.bf16.gmra.mrb[0].mxu0 %v407
    %v558 = vpop.f32.mrb[0].mxu0
    %v559 = vadd.f32 %v248, %v558
    %v560 = vpop.f32.mrb[0].mxu0
    %v561 = vpop.f32.mrb[0].mxu0
    %v562 = vadd.f32 %v253, %v561
    %v563 = vpop.f32.mrb[0].mxu0
    %564 = vmatprep.mubr.bf16.mxu0 0
    %565 = vmatmul.mubr.bf16.gmra.mrb[0].mxu0 %v410
    %v566 = vpop.f32.mrb[0].mxu0
    %v567 = vadd.f32 %v258, %v566
    %v568 = vpop.f32.mrb[0].mxu0
    %v569 = vpop.f32.mrb[0].mxu0
    %v570 = vadd.f32 %v263, %v569
    %v571 = vpop.f32.mrb[0].mxu0
    %572 = vdwg.mxu0
    %v573 = vtanh.pop %v447
    %v574 = vtanh.pop %v450
    %v575 = vtanh.pop %v455
    %v576 = vtanh.pop %v458
    %v577 = vtanh.pop %v463
    %v578 = vtanh.pop %v466
    %v579 = vtanh.pop %v471
    %v580 = vtanh.pop %v474
    %v581 = vtanh.pop %v479
    %v582 = vtanh.pop %v482
    %v583 = vtanh.pop %v487
    %v584 = vtanh.pop %v490
    %v585 = vtanh.pop %v495
    %v586 = vtanh.pop %v498
    %v587 = vtanh.pop %v503
    %v588 = vtanh.pop %v506
    %v589 = vtanh.pop %v511
    %v590 = vtanh.pop %v514
    %v591 = vtanh.pop %v519
    %v592 = vtanh.pop %v522
    %v593 = vtanh.pop %v527
    %v594 = vtanh.pop %v530
    %v595 = vtanh.pop %v535
    %v596 = vtanh.pop %v538
    %v597 = vtanh.pop %v543
    %v598 = vtanh.pop %v546
    %v599 = vtanh.pop %v551
    %v600 = vtanh.pop %v554
    %v601 = vtanh.pop %v559
    %v602 = vtanh.pop %v562
    %v603 = vtanh.pop %v567
    %v604 = vtanh.pop %v570
    %v605 = vld [vmem:[%s3] sm:$0xff]
    %v606 = vld [vmem:[%s3 + $0x8] sm:$0xff]
    %v607 = vld [vmem:[%s3 + $0x10] sm:$0xff]
    %v608 = vld [vmem:[%s3 + $0x18] sm:$0xff]
    %v609 = vld [vmem:[%s3 + $0x20] sm:$0xff]
    %v610 = vld [vmem:[%s3 + $0x28] sm:$0xff]
    %v611 = vld [vmem:[%s3 + $0x30] sm:$0xff]
    %v612 = vld [vmem:[%s3 + $0x38] sm:$0xff]
    %v613 = vld [vmem:[%s3 + $0x40] sm:$0xff]
    %v614 = vld [vmem:[%s3 + $0x48] sm:$0xff]
    %v615 = vld [vmem:[%s3 + $0x50] sm:$0xff]
    %v616 = vld [vmem:[%s3 + $0x58] sm:$0xff]
    %v617 = vld [vmem:[%s3 + $0x60] sm:$0xff]
    %v618 = vld [vmem:[%s3 + $0x68] sm:$0xff]
    %v619 = vld [vmem:[%s3 + $0x70] sm:$0xff]
    %v620 = vld [vmem:[%s3 + $0x78] sm:$0xff]
    %v621 = vld [vmem:[%s3 + $0x80] sm:$0xff]
    %v622 = vld [vmem:[%s3 + $0x88] sm:$0xff]
    %v623 = vld [vmem:[%s3 + $0x90] sm:$0xff]
    %v624 = vld [vmem:[%s3 + $0x98] sm:$0xff]
    %v625 = vld [vmem:[%s3 + $0xa0] sm:$0xff]
    %v626 = vld [vmem:[%s3 + $0xa8] sm:$0xff]
    %v627 = vld [vmem:[%s3 + $0xb0] sm:$0xff]
    %v628 = vld [vmem:[%s3 + $0xb8] sm:$0xff]
    %v629 = vld [vmem:[%s3 + $0xc0] sm:$0xff]
    %v630 = vld [vmem:[%s3 + $0xc8] sm:$0xff]
    %v631 = vld [vmem:[%s3 + $0xd0] sm:$0xff]
    %v632 = vld [vmem:[%s3 + $0xd8] sm:$0xff]
    %v633 = vld [vmem:[%s3 + $0xe0] sm:$0xff]
    %v634 = vld [vmem:[%s3 + $0xe8] sm:$0xff]
    %v635 = vld [vmem:[%s3 + $0xf0] sm:$0xff]
    %v636 = vld [vmem:[%s3 + $0xf8] sm:$0xff]
    %v637 = vpack.c.bf16 %v574, %v573
    %v638 = vpack.c.bf16 %v576, %v575
    %v639 = vpack.c.bf16 %v578, %v577
    %v640 = vpack.c.bf16 %v580, %v579
    %v641 = vpack.c.bf16 %v582, %v581
    %v642 = vpack.c.bf16 %v584, %v583
    %v643 = vpack.c.bf16 %v586, %v585
    %v644 = vpack.c.bf16 %v588, %v587
    %v645 = vpack.c.bf16 %v590, %v589
    %v646 = vpack.c.bf16 %v592, %v591
    %v647 = vpack.c.bf16 %v594, %v593
    %v648 = vpack.c.bf16 %v596, %v595
    %v649 = vpack.c.bf16 %v598, %v597
    %v650 = vpack.c.bf16 %v600, %v599
    %v651 = vpack.c.bf16 %v602, %v601
    %v652 = vpack.c.bf16 %v604, %v603
    %v653 = vld [vmem:[%s4] sm:$0xff]
    %v654 = vld [vmem:[%s4 + $0x8] sm:$0xff]
    %v655 = vld [vmem:[%s4 + $0x10] sm:$0xff]
    %v656 = vld [vmem:[%s4 + $0x18] sm:$0xff]
    %v657 = vld [vmem:[%s4 + $0x20] sm:$0xff]
    %v658 = vld [vmem:[%s4 + $0x28] sm:$0xff]
    %v659 = vld [vmem:[%s4 + $0x30] sm:$0xff]
    %v660 = vld [vmem:[%s4 + $0x38] sm:$0xff]
    %v661 = vld [vmem:[%s4 + $0x40] sm:$0xff]
    %v662 = vld [vmem:[%s4 + $0x48] sm:$0xff]
    %v663 = vld [vmem:[%s4 + $0x50] sm:$0xff]
    %v664 = vld [vmem:[%s4 + $0x58] sm:$0xff]
    %v665 = vld [vmem:[%s4 + $0x60] sm:$0xff]
    %v666 = vld [vmem:[%s4 + $0x68] sm:$0xff]
    %v667 = vld [vmem:[%s4 + $0x70] sm:$0xff]
    %v668 = vld [vmem:[%s4 + $0x78] sm:$0xff]
    %v669 = vld [vmem:[%s4 + $0x80] sm:$0xff]
    %v670 = vld [vmem:[%s4 + $0x88] sm:$0xff]
    %v671 = vld [vmem:[%s4 + $0x90] sm:$0xff]
    %v672 = vld [vmem:[%s4 + $0x98] sm:$0xff]
    %v673 = vld [vmem:[%s4 + $0xa0] sm:$0xff]
    %v674 = vld [vmem:[%s4 + $0xa8] sm:$0xff]
    %v675 = vld [vmem:[%s4 + $0xb0] sm:$0xff]
    %v676 = vld [vmem:[%s4 + $0xb8] sm:$0xff]
    %v677 = vld [vmem:[%s4 + $0xc0] sm:$0xff]
    %v678 = vld [vmem:[%s4 + $0xc8] sm:$0xff]
    %v679 = vld [vmem:[%s4 + $0xd0] sm:$0xff]
    %v680 = vld [vmem:[%s4 + $0xd8] sm:$0xff]
    %v681 = vld [vmem:[%s4 + $0xe0] sm:$0xff]
    %v682 = vld [vmem:[%s4 + $0xe8] sm:$0xff]
    %v683 = vld [vmem:[%s4 + $0xf0] sm:$0xff]
    %v684 = vld [vmem:[%s4 + $0xf8] sm:$0xff]
    %686 = vset.pattern.permute.xlu0 0
    %687 = vperm.xlu0 %686, %v653
    %v688 = vpop.permute.xlu0 %687
    %691 = vset.pattern.permute.xlu0 0
    %692 = vperm.xlu0 %691, %v654
    %v693 = vpop.permute.xlu0 %692
    %696 = vset.pattern.permute.xlu0 0
    %697 = vperm.xlu0 %696, %v655
    %v698 = vpop.permute.xlu0 %697
    %701 = vset.pattern.permute.xlu0 0
    %702 = vperm.xlu0 %701, %v656
    %v703 = vpop.permute.xlu0 %702
    %706 = vset.pattern.permute.xlu0 0
    %707 = vperm.xlu0 %706, %v657
    %v708 = vpop.permute.xlu0 %707
    %711 = vset.pattern.permute.xlu0 0
    %712 = vperm.xlu0 %711, %v658
    %v713 = vpop.permute.xlu0 %712
    %716 = vset.pattern.permute.xlu0 0
    %717 = vperm.xlu0 %716, %v659
    %v718 = vpop.permute.xlu0 %717
    %721 = vset.pattern.permute.xlu0 0
    %722 = vperm.xlu0 %721, %v660
    %v723 = vpop.permute.xlu0 %722
    %726 = vset.pattern.permute.xlu0 0
    %727 = vperm.xlu0 %726, %v661
    %v728 = vpop.permute.xlu0 %727
    %731 = vset.pattern.permute.xlu0 0
    %732 = vperm.xlu0 %731, %v662
    %v733 = vpop.permute.xlu0 %732
    %736 = vset.pattern.permute.xlu0 0
    %737 = vperm.xlu0 %736, %v663
    %v738 = vpop.permute.xlu0 %737
    %741 = vset.pattern.permute.xlu0 0
    %742 = vperm.xlu0 %741, %v664
    %v743 = vpop.permute.xlu0 %742
    %746 = vset.pattern.permute.xlu0 0
    %747 = vperm.xlu0 %746, %v665
    %v748 = vpop.permute.xlu0 %747
    %751 = vset.pattern.permute.xlu0 0
    %752 = vperm.xlu0 %751, %v666
    %v753 = vpop.permute.xlu0 %752
    %756 = vset.pattern.permute.xlu0 0
    %757 = vperm.xlu0 %756, %v667
    %v758 = vpop.permute.xlu0 %757
    %761 = vset.pattern.permute.xlu0 0
    %762 = vperm.xlu0 %761, %v668
    %v763 = vpop.permute.xlu0 %762
    %766 = vset.pattern.permute.xlu0 0
    %767 = vperm.xlu0 %766, %v669
    %v768 = vpop.permute.xlu0 %767
    %771 = vset.pattern.permute.xlu0 0
    %772 = vperm.xlu0 %771, %v670
    %v773 = vpop.permute.xlu0 %772
    %776 = vset.pattern.permute.xlu0 0
    %777 = vperm.xlu0 %776, %v671
    %v778 = vpop.permute.xlu0 %777
    %781 = vset.pattern.permute.xlu0 0
    %782 = vperm.xlu0 %781, %v672
    %v783 = vpop.permute.xlu0 %782
    %786 = vset.pattern.permute.xlu0 0
    %787 = vperm.xlu0 %786, %v673
    %v788 = vpop.permute.xlu0 %787
    %791 = vset.pattern.permute.xlu0 0
    %792 = vperm.xlu0 %791, %v674
    %v793 = vpop.permute.xlu0 %792
    %796 = vset.pattern.permute.xlu0 0
    %797 = vperm.xlu0 %796, %v675
    %v798 = vpop.permute.xlu0 %797
    %801 = vset.pattern.permute.xlu0 0
    %802 = vperm.xlu0 %801, %v676
    %v803 = vpop.permute.xlu0 %802
    %806 = vset.pattern.permute.xlu0 0
    %807 = vperm.xlu0 %806, %v677
    %v808 = vpop.permute.xlu0 %807
    %811 = vset.pattern.permute.xlu0 0
    %812 = vperm.xlu0 %811, %v678
    %v813 = vpop.permute.xlu0 %812
    %816 = vset.pattern.permute.xlu0 0
    %817 = vperm.xlu0 %816, %v679
    %v818 = vpop.permute.xlu0 %817
    %821 = vset.pattern.permute.xlu0 0
    %822 = vperm.xlu0 %821, %v680
    %v823 = vpop.permute.xlu0 %822
    %826 = vset.pattern.permute.xlu0 0
    %827 = vperm.xlu0 %826, %v681
    %v828 = vpop.permute.xlu0 %827
    %831 = vset.pattern.permute.xlu0 0
    %832 = vperm.xlu0 %831, %v682
    %v833 = vpop.permute.xlu0 %832
    %836 = vset.pattern.permute.xlu0 0
    %837 = vperm.xlu0 %836, %v683
    %v838 = vpop.permute.xlu0 %837
    %841 = vset.pattern.permute.xlu0 0
    %842 = vperm.xlu0 %841, %v684
    %v843 = vpop.permute.xlu0 %842
    %v877 = vunpack.c.l.b16 %v605
    %v878 = vunpack.c.h.b16 %v605
    %v879 = vunpack.c.l.b16 %v606
    %v880 = vunpack.c.h.b16 %v606
    %v881 = vunpack.c.l.b16 %v607
    %v882 = vunpack.c.h.b16 %v607
    %v883 = vunpack.c.l.b16 %v608
    %v884 = vunpack.c.h.b16 %v608
    %v885 = vunpack.c.l.b16 %v609
    %v886 = vunpack.c.h.b16 %v609
    %v887 = vunpack.c.l.b16 %v610
    %v888 = vunpack.c.h.b16 %v610
    %v889 = vunpack.c.l.b16 %v611
    %v890 = vunpack.c.h.b16 %v611
    %v891 = vunpack.c.l.b16 %v612
    %v892 = vunpack.c.h.b16 %v612
    %v893 = vunpack.c.l.b16 %v613
    %v894 = vunpack.c.h.b16 %v613
    %v895 = vunpack.c.l.b16 %v614
    %v896 = vunpack.c.h.b16 %v614
    %v897 = vunpack.c.l.b16 %v615
    %v898 = vunpack.c.h.b16 %v615
    %v899 = vunpack.c.l.b16 %v616
    %v900 = vunpack.c.h.b16 %v616
    %v901 = vunpack.c.l.b16 %v617
    %v902 = vunpack.c.h.b16 %v617
    %v903 = vunpack.c.l.b16 %v618
    %v904 = vunpack.c.h.b16 %v618
    %v905 = vunpack.c.l.b16 %v619
    %v906 = vunpack.c.h.b16 %v619
    %v907 = vunpack.c.l.b16 %v620
    %v908 = vunpack.c.h.b16 %v620
    %v909 = vunpack.c.l.b16 %v621
    %v910 = vunpack.c.h.b16 %v621
    %v911 = vunpack.c.l.b16 %v622
    %v912 = vunpack.c.h.b16 %v622
    %v913 = vunpack.c.l.b16 %v623
    %v914 = vunpack.c.h.b16 %v623
    %v915 = vunpack.c.l.b16 %v624
    %v916 = vunpack.c.h.b16 %v624
    %v917 = vunpack.c.l.b16 %v625
    %v918 = vunpack.c.h.b16 %v625
    %v919 = vunpack.c.l.b16 %v626
    %v920 = vunpack.c.h.b16 %v626
    %v921 = vunpack.c.l.b16 %v627
    %v922 = vunpack.c.h.b16 %v627
    %v923 = vunpack.c.l.b16 %v628
    %v924 = vunpack.c.h.b16 %v628
    %v925 = vunpack.c.l.b16 %v629
    %v926 = vunpack.c.h.b16 %v629
    %v927 = vunpack.c.l.b16 %v630
    %v928 = vunpack.c.h.b16 %v630
    %v929 = vunpack.c.l.b16 %v631
    %v930 = vunpack.c.h.b16 %v631
    %v931 = vunpack.c.l.b16 %v632
    %v932 = vunpack.c.h.b16 %v632
    %v933 = vunpack.c.l.b16 %v633
    %v934 = vunpack.c.h.b16 %v633
    %v935 = vunpack.c.l.b16 %v634
    %v936 = vunpack.c.h.b16 %v634
    %v937 = vunpack.c.l.b16 %v635
    %v938 = vunpack.c.h.b16 %v635
    %v939 = vunpack.c.l.b16 %v636
    %v940 = vunpack.c.h.b16 %v636
    %v941 = vpack.c.b16 %v879, %v877
    %v942 = vpack.c.b16 %v880, %v878
    %v943 = vpack.c.b16 %v883, %v881
    %v944 = vpack.c.b16 %v884, %v882
    %v945 = vpack.c.b16 %v887, %v885
    %v946 = vpack.c.b16 %v888, %v886
    %v947 = vpack.c.b16 %v891, %v889
    %v948 = vpack.c.b16 %v892, %v890
    %v949 = vpack.c.b16 %v895, %v893
    %v950 = vpack.c.b16 %v896, %v894
    %v951 = vpack.c.b16 %v899, %v897
    %v952 = vpack.c.b16 %v900, %v898
    %v953 = vpack.c.b16 %v903, %v901
    %v954 = vpack.c.b16 %v904, %v902
    %v955 = vpack.c.b16 %v907, %v905
    %v956 = vpack.c.b16 %v908, %v906
    %v957 = vpack.c.b16 %v911, %v909
    %v958 = vpack.c.b16 %v912, %v910
    %v959 = vpack.c.b16 %v915, %v913
    %v960 = vpack.c.b16 %v916, %v914
    %v961 = vpack.c.b16 %v919, %v917
    %v962 = vpack.c.b16 %v920, %v918
    %v963 = vpack.c.b16 %v923, %v921
    %v964 = vpack.c.b16 %v924, %v922
    %v965 = vpack.c.b16 %v927, %v925
    %v966 = vpack.c.b16 %v928, %v926
    %v967 = vpack.c.b16 %v931, %v929
    %v968 = vpack.c.b16 %v932, %v930
    %v969 = vpack.c.b16 %v935, %v933
    %v970 = vpack.c.b16 %v936, %v934
    %v971 = vpack.c.b16 %v939, %v937
    %v972 = vpack.c.b16 %v940, %v938
    %1005 = vmatprep.subr.bf16.mxu0 0
    %1006 = vmatpush1.bf16.msra.mxu0 %v637
    %1007 = vmatprep.subr.bf16.mxu0 0
    %1008 = vmatpush1.bf16.msra.mxu0 %v638
    %1009 = vmatprep.subr.bf16.mxu0 0
    %1010 = vmatpush1.bf16.msra.mxu0 %v639
    %1011 = vmatprep.subr.bf16.mxu0 0
    %1012 = vmatpush1.bf16.msra.mxu0 %v640
    %1013 = vmatprep.subr.bf16.mxu0 0
    %1014 = vmatpush1.bf16.msra.mxu0 %v641
    %1015 = vmatprep.subr.bf16.mxu0 0
    %1016 = vmatpush1.bf16.msra.mxu0 %v642
    %1017 = vmatprep.subr.bf16.mxu0 0
    %1018 = vmatpush1.bf16.msra.mxu0 %v643
    %1019 = vmatprep.subr.bf16.mxu0 0
    %1020 = vmatpush1.bf16.msra.mxu0 %v644
    %1021 = vmatprep.subr.bf16.mxu0 0
    %1022 = vmatpush1.bf16.msra.mxu0 %v645
    %1023 = vmatprep.subr.bf16.mxu0 0
    %1024 = vmatpush1.bf16.msra.mxu0 %v646
    %1025 = vmatprep.subr.bf16.mxu0 0
    %1026 = vmatpush1.bf16.msra.mxu0 %v647
    %1027 = vmatprep.subr.bf16.mxu0 0
    %1028 = vmatpush1.bf16.msra.mxu0 %v648
    %1029 = vmatprep.subr.bf16.mxu0 0
    %1030 = vmatpush1.bf16.msra.mxu0 %v649
    %1031 = vmatprep.subr.bf16.mxu0 0
    %1032 = vmatpush1.bf16.msra.mxu0 %v650
    %1033 = vmatprep.subr.bf16.mxu0 0
    %1034 = vmatpush1.bf16.msra.mxu0 %v651
    %1035 = vmatprep.subr.bf16.mxu0 0
    %1036 = vmatpush1.bf16.msra.mxu0 %v652
    %1037 = vmatprep.mubr.bf16.mxu0 %v942
    %1038 = vmatmul.mubr.bf16.gmra.mrb[0].mxu0 %v941
    %v1039 = vpop.f32.mrb[0].mxu0
    %v1040 = vadd.f32 %v688, %v1039
    %v1041 = vpop.f32.mrb[0].mxu0
    %v1042 = vpop.f32.mrb[0].mxu0
    %v1043 = vadd.f32 %v693, %v1042
    %v1044 = vpop.f32.mrb[0].mxu0
    %1045 = vmatprep.mubr.bf16.mxu0 %v944
    %1046 = vmatmul.mubr.bf16.gmra.mrb[0].mxu0 %v943
    %v1047 = vpop.f32.mrb[0].mxu0
    %v1048 = vadd.f32 %v698, %v1047
    %v1049 = vpop.f32.mrb[0].mxu0
    %v1050 = vpop.f32.mrb[0].mxu0
    %v1051 = vadd.f32 %v703, %v1050
    %v1052 = vpop.f32.mrb[0].mxu0
    %1053 = vmatprep.mubr.bf16.mxu0 %v946
    %1054 = vmatmul.mubr.bf16.gmra.mrb[0].mxu0 %v945
    %v1055 = vpop.f32.mrb[0].mxu0
    %v1056 = vadd.f32 %v708, %v1055
    %v1057 = vpop.f32.mrb[0].mxu0
    %v1058 = vpop.f32.mrb[0].mxu0
    %v1059 = vadd.f32 %v713, %v1058
    %v1060 = vpop.f32.mrb[0].mxu0
    %1061 = vmatprep.mubr.bf16.mxu0 %v948
    %1062 = vmatmul.mubr.bf16.gmra.mrb[0].mxu0 %v947
    %v1063 = vpop.f32.mrb[0].mxu0
    %v1064 = vadd.f32 %v718, %v1063
    %v1065 = vpop.f32.mrb[0].mxu0
    %v1066 = vpop.f32.mrb[0].mxu0
    %v1067 = vadd.f32 %v723, %v1066
    %v1068 = vpop.f32.mrb[0].mxu0
    %1069 = vmatprep.mubr.bf16.mxu0 %v950
    %1070 = vmatmul.mubr.bf16.gmra.mrb[0].mxu0 %v949
    %v1071 = vpop.f32.mrb[0].mxu0
    %v1072 = vadd.f32 %v728, %v1071
    %v1073 = vpop.f32.mrb[0].mxu0
    %v1074 = vpop.f32.mrb[0].mxu0
    %v1075 = vadd.f32 %v733, %v1074
    %v1076 = vpop.f32.mrb[0].mxu0
    %1077 = vmatprep.mubr.bf16.mxu0 %v952
    %1078 = vmatmul.mubr.bf16.gmra.mrb[0].mxu0 %v951
    %v1079 = vpop.f32.mrb[0].mxu0
    %v1080 = vadd.f32 %v738, %v1079
    %v1081 = vpop.f32.mrb[0].mxu0
    %v1082 = vpop.f32.mrb[0].mxu0
    %v1083 = vadd.f32 %v743, %v1082
    %v1084 = vpop.f32.mrb[0].mxu0
    %1085 = vmatprep.mubr.bf16.mxu0 %v954
    %1086 = vmatmul.mubr.bf16.gmra.mrb[0].mxu0 %v953
    %v1087 = vpop.f32.mrb[0].mxu0
    %v1088 = vadd.f32 %v748, %v1087
    %v1089 = vpop.f32.mrb[0].mxu0
    %v1090 = vpop.f32.mrb[0].mxu0
    %v1091 = vadd.f32 %v753, %v1090
    %v1092 = vpop.f32.mrb[0].mxu0
    %1093 = vmatprep.mubr.bf16.mxu0 %v956
    %1094 = vmatmul.mubr.bf16.gmra.mrb[0].mxu0 %v955
    %v1095 = vpop.f32.mrb[0].mxu0
    %v1096 = vadd.f32 %v758, %v1095
    %v1097 = vpop.f32.mrb[0].mxu0
    %v1098 = vpop.f32.mrb[0].mxu0
    %v1099 = vadd.f32 %v763, %v1098
    %v1100 = vpop.f32.mrb[0].mxu0
    %1101 = vmatprep.mubr.bf16.mxu0 %v958
    %1102 = vmatmul.mubr.bf16.gmra.mrb[0].mxu0 %v957
    %v1103 = vpop.f32.mrb[0].mxu0
    %v1104 = vadd.f32 %v768, %v1103
    %v1105 = vpop.f32.mrb[0].mxu0
    %v1106 = vpop.f32.mrb[0].mxu0
    %v1107 = vadd.f32 %v773, %v1106
    %v1108 = vpop.f32.mrb[0].mxu0
    %1109 = vmatprep.mubr.bf16.mxu0 %v960
    %1110 = vmatmul.mubr.bf16.gmra.mrb[0].mxu0 %v959
    %v1111 = vpop.f32.mrb[0].mxu0
    %v1112 = vadd.f32 %v778, %v1111
    %v1113 = vpop.f32.mrb[0].mxu0
    %v1114 = vpop.f32.mrb[0].mxu0
    %v1115 = vadd.f32 %v783, %v1114
    %v1116 = vpop.f32.mrb[0].mxu0
    %1117 = vmatprep.mubr.bf16.mxu0 %v962
    %1118 = vmatmul.mubr.bf16.gmra.mrb[0].mxu0 %v961
    %v1119 = vpop.f32.mrb[0].mxu0
    %v1120 = vadd.f32 %v788, %v1119
    %v1121 = vpop.f32.mrb[0].mxu0
    %v1122 = vpop.f32.mrb[0].mxu0
    %v1123 = vadd.f32 %v793, %v1122
    %v1124 = vpop.f32.mrb[0].mxu0
    %1125 = vmatprep.mubr.bf16.mxu0 %v964
    %1126 = vmatmul.mubr.bf16.gmra.mrb[0].mxu0 %v963
    %v1127 = vpop.f32.mrb[0].mxu0
    %v1128 = vadd.f32 %v798, %v1127
    %v1129 = vpop.f32.mrb[0].mxu0
    %v1130 = vpop.f32.mrb[0].mxu0
    %v1131 = vadd.f32 %v803, %v1130
    %v1132 = vpop.f32.mrb[0].mxu0
    %1133 = vmatprep.mubr.bf16.mxu0 %v966
    %1134 = vmatmul.mubr.bf16.gmra.mrb[0].mxu0 %v965
    %v1135 = vpop.f32.mrb[0].mxu0
    %v1136 = vadd.f32 %v808, %v1135
    %v1137 = vpop.f32.mrb[0].mxu0
    %v1138 = vpop.f32.mrb[0].mxu0
    %v1139 = vadd.f32 %v813, %v1138
    %v1140 = vpop.f32.mrb[0].mxu0
    %1141 = vmatprep.mubr.bf16.mxu0 %v968
    %1142 = vmatmul.mubr.bf16.gmra.mrb[0].mxu0 %v967
    %v1143 = vpop.f32.mrb[0].mxu0
    %v1144 = vadd.f32 %v818, %v1143
    %v1145 = vpop.f32.mrb[0].mxu0
    %v1146 = vpop.f32.mrb[0].mxu0
    %v1147 = vadd.f32 %v823, %v1146
    %v1148 = vpop.f32.mrb[0].mxu0
    %1149 = vmatprep.mubr.bf16.mxu0 %v970
    %1150 = vmatmul.mubr.bf16.gmra.mrb[0].mxu0 %v969
    %v1151 = vpop.f32.mrb[0].mxu0
    %v1152 = vadd.f32 %v828, %v1151
    %v1153 = vpop.f32.mrb[0].mxu0
    %v1154 = vpop.f32.mrb[0].mxu0
    %v1155 = vadd.f32 %v833, %v1154
    %v1156 = vpop.f32.mrb[0].mxu0
    %1157 = vmatprep.mubr.bf16.mxu0 %v972
    %1158 = vmatmul.mubr.bf16.gmra.mrb[0].mxu0 %v971
    %v1159 = vpop.f32.mrb[0].mxu0
    %v1160 = vadd.f32 %v838, %v1159
    %v1161 = vpop.f32.mrb[0].mxu0
    %v1162 = vpop.f32.mrb[0].mxu0
    %v1163 = vadd.f32 %v843, %v1162
    %v1164 = vpop.f32.mrb[0].mxu0
    %1165 = vdwg.mxu0
    %v1166 = vmax.f32 %v1040, 0.0
    %v1167 = vmax.f32 %v1043, 0.0
    %v1168 = vmax.f32 %v1048, 0.0
    %v1169 = vmax.f32 %v1051, 0.0
    %v1170 = vmax.f32 %v1056, 0.0
    %v1171 = vmax.f32 %v1059, 0.0
    %v1172 = vmax.f32 %v1064, 0.0
    %v1173 = vmax.f32 %v1067, 0.0
    %v1174 = vmax.f32 %v1072, 0.0
    %v1175 = vmax.f32 %v1075, 0.0
    %v1176 = vmax.f32 %v1080, 0.0
    %v1177 = vmax.f32 %v1083, 0.0
    %v1178 = vmax.f32 %v1088, 0.0
    %v1179 = vmax.f32 %v1091, 0.0
    %v1180 = vmax.f32 %v1096, 0.0
    %v1181 = vmax.f32 %v1099, 0.0
    %v1182 = vmax.f32 %v1104, 0.0
    %v1183 = vmax.f32 %v1107, 0.0
    %v1184 = vmax.f32 %v1112, 0.0
    %v1185 = vmax.f32 %v1115, 0.0
    %v1186 = vmax.f32 %v1120, 0.0
    %v1187 = vmax.f32 %v1123, 0.0
    %v1188 = vmax.f32 %v1128, 0.0
    %v1189 = vmax.f32 %v1131, 0.0
    %v1190 = vmax.f32 %v1136, 0.0
    %v1191 = vmax.f32 %v1139, 0.0
    %v1192 = vmax.f32 %v1144, 0.0
    %v1193 = vmax.f32 %v1147, 0.0
    %v1194 = vmax.f32 %v1152, 0.0
    %v1195 = vmax.f32 %v1155, 0.0
    %v1196 = vmax.f32 %v1160, 0.0
    %v1197 = vmax.f32 %v1163, 0.0
    %v1198 = vld [vmem:[%s5] sm:$0xff]
    %v1199 = vld [vmem:[%s5 + $0x8] sm:$0xff]
    %v1200 = vld [vmem:[%s5 + $0x10] sm:$0xff]
    %v1201 = vld [vmem:[%s5 + $0x18] sm:$0xff]
    %v1202 = vld [vmem:[%s5 + $0x20] sm:$0xff]
    %v1203 = vld [vmem:[%s5 + $0x28] sm:$0xff]
    %v1204 = vld [vmem:[%s5 + $0x30] sm:$0xff]
    %v1205 = vld [vmem:[%s5 + $0x38] sm:$0xff]
    %v1206 = vpack.c.bf16 %v1167, %v1166
    %v1207 = vpack.c.bf16 %v1169, %v1168
    %v1208 = vpack.c.bf16 %v1171, %v1170
    %v1209 = vpack.c.bf16 %v1173, %v1172
    %v1210 = vpack.c.bf16 %v1175, %v1174
    %v1211 = vpack.c.bf16 %v1177, %v1176
    %v1212 = vpack.c.bf16 %v1179, %v1178
    %v1213 = vpack.c.bf16 %v1181, %v1180
    %v1214 = vpack.c.bf16 %v1183, %v1182
    %v1215 = vpack.c.bf16 %v1185, %v1184
    %v1216 = vpack.c.bf16 %v1187, %v1186
    %v1217 = vpack.c.bf16 %v1189, %v1188
    %v1218 = vpack.c.bf16 %v1191, %v1190
    %v1219 = vpack.c.bf16 %v1193, %v1192
    %v1220 = vpack.c.bf16 %v1195, %v1194
    %v1221 = vpack.c.bf16 %v1197, %v1196
    %v1222 = vld [vmem:[%s6] sm:$0xff]
    %v1223 = vld [vmem:[%s6 + $0x8] sm:$0xff]
    %v1224 = vld [vmem:[%s6 + $0x10] sm:$0xff]
    %v1225 = vld [vmem:[%s6 + $0x18] sm:$0xff]
    %v1226 = vld [vmem:[%s6 + $0x20] sm:$0xff]
    %v1227 = vld [vmem:[%s6 + $0x28] sm:$0xff]
    %v1228 = vld [vmem:[%s6 + $0x30] sm:$0xff]
    %v1229 = vld [vmem:[%s6 + $0x38] sm:$0xff]
    %1231 = vset.pattern.permute.xlu0 0
    %1232 = vperm.xlu0 %1231, %v1222
    %v1233 = vpop.permute.xlu0 %1232
    %1236 = vset.pattern.permute.xlu0 0
    %1237 = vperm.xlu0 %1236, %v1223
    %v1238 = vpop.permute.xlu0 %1237
    %1241 = vset.pattern.permute.xlu0 0
    %1242 = vperm.xlu0 %1241, %v1224
    %v1243 = vpop.permute.xlu0 %1242
    %1246 = vset.pattern.permute.xlu0 0
    %1247 = vperm.xlu0 %1246, %v1225
    %v1248 = vpop.permute.xlu0 %1247
    %1251 = vset.pattern.permute.xlu0 0
    %1252 = vperm.xlu0 %1251, %v1226
    %v1253 = vpop.permute.xlu0 %1252
    %1256 = vset.pattern.permute.xlu0 0
    %1257 = vperm.xlu0 %1256, %v1227
    %v1258 = vpop.permute.xlu0 %1257
    %1261 = vset.pattern.permute.xlu0 0
    %1262 = vperm.xlu0 %1261, %v1228
    %v1263 = vpop.permute.xlu0 %1262
    %1266 = vset.pattern.permute.xlu0 0
    %1267 = vperm.xlu0 %1266, %v1229
    %v1268 = vpop.permute.xlu0 %1267
    %v1278 = vunpack.c.l.b16 %v1198
    %v1279 = vunpack.c.h.b16 %v1198
    %v1280 = vunpack.c.l.b16 %v1199
    %v1281 = vunpack.c.h.b16 %v1199
    %v1282 = vunpack.c.l.b16 %v1200
    %v1283 = vunpack.c.h.b16 %v1200
    %v1284 = vunpack.c.l.b16 %v1201
    %v1285 = vunpack.c.h.b16 %v1201
    %v1286 = vunpack.c.l.b16 %v1202
    %v1287 = vunpack.c.h.b16 %v1202
    %v1288 = vunpack.c.l.b16 %v1203
    %v1289 = vunpack.c.h.b16 %v1203
    %v1290 = vunpack.c.l.b16 %v1204
    %v1291 = vunpack.c.h.b16 %v1204
    %v1292 = vunpack.c.l.b16 %v1205
    %v1293 = vunpack.c.h.b16 %v1205
    %v1294 = vpack.c.b16 %v1280, %v1278
    %v1295 = vpack.c.b16 %v1281, %v1279
    %v1296 = vpack.c.b16 %v1284, %v1282
    %v1297 = vpack.c.b16 %v1285, %v1283
    %v1298 = vpack.c.b16 %v1288, %v1286
    %v1299 = vpack.c.b16 %v1289, %v1287
    %v1300 = vpack.c.b16 %v1292, %v1290
    %v1301 = vpack.c.b16 %v1293, %v1291
    %1310 = vmatprep.subr.bf16.mxu0 0
    %1311 = vmatpush1.bf16.msra.mxu0 %v1206
    %1312 = vmatprep.subr.bf16.mxu0 0
    %1313 = vmatpush1.bf16.msra.mxu0 %v1207
    %1314 = vmatprep.subr.bf16.mxu0 0
    %1315 = vmatpush1.bf16.msra.mxu0 %v1208
    %1316 = vmatprep.subr.bf16.mxu0 0
    %1317 = vmatpush1.bf16.msra.mxu0 %v1209
    %1318 = vmatprep.subr.bf16.mxu0 0
    %1319 = vmatpush1.bf16.msra.mxu0 %v1210
    %1320 = vmatprep.subr.bf16.mxu0 0
    %1321 = vmatpush1.bf16.msra.mxu0 %v1211
    %1322 = vmatprep.subr.bf16.mxu0 0
    %1323 = vmatpush1.bf16.msra.mxu0 %v1212
    %1324 = vmatprep.subr.bf16.mxu0 0
    %1325 = vmatpush1.bf16.msra.mxu0 %v1213
    %1326 = vmatprep.subr.bf16.mxu0 0
    %1327 = vmatpush1.bf16.msra.mxu0 %v1214
    %1328 = vmatprep.subr.bf16.mxu0 0
    %1329 = vmatpush1.bf16.msra.mxu0 %v1215
    %1330 = vmatprep.subr.bf16.mxu0 0
    %1331 = vmatpush1.bf16.msra.mxu0 %v1216
    %1332 = vmatprep.subr.bf16.mxu0 0
    %1333 = vmatpush1.bf16.msra.mxu0 %v1217
    %1334 = vmatprep.subr.bf16.mxu0 0
    %1335 = vmatpush1.bf16.msra.mxu0 %v1218
    %1336 = vmatprep.subr.bf16.mxu0 0
    %1337 = vmatpush1.bf16.msra.mxu0 %v1219
    %1338 = vmatprep.subr.bf16.mxu0 0
    %1339 = vmatpush1.bf16.msra.mxu0 %v1220
    %1340 = vmatprep.subr.bf16.mxu0 0
    %1341 = vmatpush1.bf16.msra.mxu0 %v1221
    %1342 = vmatprep.mubr.bf16.mxu0 %v1295
    %1343 = vmatmul.mubr.bf16.gmra.mrb[0].mxu0 %v1294
    %v1344 = vpop.f32.mrb[0].mxu0
    %v1345 = vadd.f32 %v1233, %v1344
    %v1346 = vpop.f32.mrb[0].mxu0
    %v1347 = vpop.f32.mrb[0].mxu0
    %v1348 = vadd.f32 %v1238, %v1347
    %v1349 = vpop.f32.mrb[0].mxu0
    %1350 = vmatprep.mubr.bf16.mxu0 %v1297
    %1351 = vmatmul.mubr.bf16.gmra.mrb[0].mxu0 %v1296
    %v1352 = vpop.f32.mrb[0].mxu0
    %v1353 = vadd.f32 %v1243, %v1352
    %v1354 = vpop.f32.mrb[0].mxu0
    %v1355 = vpop.f32.mrb[0].mxu0
    %v1356 = vadd.f32 %v1248, %v1355
    %v1357 = vpop.f32.mrb[0].mxu0
    %1358 = vmatprep.mubr.bf16.mxu0 %v1299
    %1359 = vmatmul.mubr.bf16.gmra.mrb[0].mxu0 %v1298
    %v1360 = vpop.f32.mrb[0].mxu0
    %v1361 = vadd.f32 %v1253, %v1360
    %v1362 = vpop.f32.mrb[0].mxu0
    %v1363 = vpop.f32.mrb[0].mxu0
    %v1364 = vadd.f32 %v1258, %v1363
    %v1365 = vpop.f32.mrb[0].mxu0
    %1366 = vmatprep.mubr.bf16.mxu0 %v1301
    %1367 = vmatmul.mubr.bf16.gmra.mrb[0].mxu0 %v1300
    %v1368 = vpop.f32.mrb[0].mxu0
    %v1369 = vadd.f32 %v1263, %v1368
    %v1370 = vpop.f32.mrb[0].mxu0
    %v1371 = vpop.f32.mrb[0].mxu0
    %v1372 = vadd.f32 %v1268, %v1371
    %v1373 = vpop.f32.mrb[0].mxu0
    %1374 = vdwg.mxu0
    %v1375 = vtanh.pop %v1345
    %v1376 = vtanh.pop %v1348
    %v1377 = vtanh.pop %v1353
    %v1378 = vtanh.pop %v1356
    %v1379 = vtanh.pop %v1361
    %v1380 = vtanh.pop %v1364
    %v1381 = vtanh.pop %v1369
    %v1382 = vtanh.pop %v1372
    %v1383 = vld [vmem:[%s7] sm:$0xff]
    %v1384 = vld [vmem:[%s7 + $0x8] sm:$0xff]
    %v1385 = vld [vmem:[%s7 + $0x10] sm:$0xff]
    %v1386 = vld [vmem:[%s7 + $0x18] sm:$0xff]
    %v1387 = vld [vmem:[%s7 + $0x20] sm:$0xff]
    %v1388 = vld [vmem:[%s7 + $0x28] sm:$0xff]
    %v1389 = vld [vmem:[%s7 + $0x30] sm:$0xff]
    %v1390 = vld [vmem:[%s7 + $0x38] sm:$0xff]
    %1392 = vset.pattern.permute.xlu0 0
    %1393 = vperm.xlu0 %1392, %v1383
    %v1394 = vpop.permute.xlu0 %1393
    %1397 = vset.pattern.permute.xlu0 0
    %1398 = vperm.xlu0 %1397, %v1384
    %v1399 = vpop.permute.xlu0 %1398
    %1402 = vset.pattern.permute.xlu0 0
    %1403 = vperm.xlu0 %1402, %v1385
    %v1404 = vpop.permute.xlu0 %1403
    %1407 = vset.pattern.permute.xlu0 0
    %1408 = vperm.xlu0 %1407, %v1386
    %v1409 = vpop.permute.xlu0 %1408
    %1412 = vset.pattern.permute.xlu0 0
    %1413 = vperm.xlu0 %1412, %v1387
    %v1414 = vpop.permute.xlu0 %1413
    %1417 = vset.pattern.permute.xlu0 0
    %1418 = vperm.xlu0 %1417, %v1388
    %v1419 = vpop.permute.xlu0 %1418
    %1422 = vset.pattern.permute.xlu0 0
    %1423 = vperm.xlu0 %1422, %v1389
    %v1424 = vpop.permute.xlu0 %1423
    %1427 = vset.pattern.permute.xlu0 0
    %1428 = vperm.xlu0 %1427, %v1390
    %v1429 = vpop.permute.xlu0 %1428
    %v1431 = vmul.f32 %v1375, %v1394
    %v1432 = vmul.f32 %v1376, %v1399
    %v1433 = vmul.f32 %v1377, %v1404
    %v1434 = vmul.f32 %v1378, %v1409
    %v1435 = vmul.f32 %v1379, %v1414
    %v1436 = vmul.f32 %v1380, %v1419
    %v1437 = vmul.f32 %v1381, %v1424
    %v1438 = vmul.f32 %v1382, %v1429
    %vm1439 = vcmask 64512
    %v1440 = vsel %vm1439, %v1431, 0.0
    %v1441 = vsel %vm1439, %v1432, 0.0
    %v1442 = vadd.f32 %v1440, %v1441
    %v1443 = vsel %vm1439, %v1433, 0.0
    %v1444 = vadd.f32 %v1442, %v1443
    %v1445 = vsel %vm1439, %v1434, 0.0
    %v1446 = vadd.f32 %v1444, %v1445
    %v1447 = vsel %vm1439, %v1435, 0.0
    %v1448 = vadd.f32 %v1446, %v1447
    %v1449 = vsel %vm1439, %v1436, 0.0
    %v1450 = vadd.f32 %v1448, %v1449
    %v1451 = vsel %vm1439, %v1437, 0.0
    %v1452 = vadd.f32 %v1450, %v1451
    %v1453 = vsel %vm1439, %v1438, 0.0
    %v1454 = vadd.f32 %v1452, %v1453
    %v1455 = vrot.slane %v1454, 4
    %v1456 = vadd.f32 %v1454, %v1455
    %v1457 = vrot.slane %v1456, 2
    %v1458 = vadd.f32 %v1456, %v1457
    %v1459 = vrot.slane %v1458, 1
    %v1460 = vadd.f32 %v1458, %v1459
    %s1461 = sld [smem:[#allocation2]]
    %v1462 = vstv %s1461
    %v1463 = vadd.f32 %v1460, %v1462
    %vm1464 = vcmask 57344
    %1465 = vst.msk [vmem:[#allocation3] sm:$0x1] %vm1464, %v1463
    // Predicated region
    $region38: #{tpu_custom_call.1} parent=1 // pred_check
      _
    $region39: #{tpu_custom_call.1} parent=1 // pred_check_branch
      %1467 = sbr.rel (0) target = $region41
    $region40: #{tpu_custom_call.1} parent=1 // pred_region
      %s1469 = ssub.s32 16, 16
      %1470 = vsyncadd [#allocation4], %s1469
      %s1472 = sshll.u32 [#allocation3], 4
      %s1473 = int_to_ptr.vmem [resolvable:$true] %s1472
      %1475 = dma.vmem_to_hbm [thread:$0]  %s1473, 16, %s9, [#allocation4]
    $region41: #{tpu_custom_call.1} parent=1 // pred_fallthru
      _
    // Predicated region
    $region42: #{tpu_custom_call.1} parent=1 // pred_check
      _
    $region43: #{tpu_custom_call.1} parent=1 // pred_check_branch
      %1477 = sbr.rel (0) target = $region45
    $region44: #{tpu_custom_call.1} parent=1 // pred_region
      %1478 = dma.done [#allocation4], 16
    $region45: #{tpu_custom_call.1} parent=1 // pred_fallthru
      _
    %1479 = vsyncpa [#allocation4], 1

</llo_original>
